<compile_context>
chip_gen: v6e
topology: v6e:2x2x1
jax: 0.10.0
libtpu: 0.0.40
codegen_flags: <defaults>
</compile_context>

<pallas_src>
import math
from functools import partial

import jax
import jax.numpy as jnp
import numpy as np
from jax.experimental import pallas as pl
from jax.experimental.pallas import tpu as pltpu


# ----------------------------------------------------------------------------
# Kernels: one (bm, bn) output block, reduction over the K grid axis.
# ----------------------------------------------------------------------------
def _matmul_bias_f32_kernel(x_ref, w_ref, b_ref, o_ref):
    """f32 output: accumulate directly into the resident output block."""
    k = pl.program_id(2)

    @pl.when(k == 0)
    def _():
        o_ref[...] = jnp.zeros_like(o_ref)

    o_ref[...] += jnp.dot(
        x_ref[...], w_ref[...], preferred_element_type=jnp.float32
    )

    @pl.when(k == pl.num_programs(2) - 1)
    def _():
        o_ref[...] = o_ref[...] + b_ref[...]


def _matmul_bias_acc_kernel(x_ref, w_ref, b_ref, o_ref, acc_ref):
    """Non-f32 output: f32 scratch accumulator, cast on the last K step."""
    k = pl.program_id(2)

    @pl.when(k == 0)
    def _():
        acc_ref[...] = jnp.zeros_like(acc_ref)

    acc_ref[...] += jnp.dot(
        x_ref[...], w_ref[...], preferred_element_type=jnp.float32
    )

    @pl.when(k == pl.num_programs(2) - 1)
    def _():
        o_ref[...] = (acc_ref[...] + b_ref[...]).astype(o_ref.dtype)


def _round_up(v, m):
    return (v + m - 1) // m * m


# ----------------------------------------------------------------------------
# Wrapper: fold merger weights, pad to lane-dense blocks, launch the GEMM.
# ----------------------------------------------------------------------------
def tiled_linear_pallas(x, fc_w, fc_b, merger_w, *, num_tiles, crossed=False):
    """Pallas implementation of TiledLinear.forward.

    x        : [..., in_features]           (native dtype, e.g. f32 / bf16)
    fc_w     : [out_features, tile_size]    (nn.Linear weight)
    fc_b     : [out_features] or None
    merger_w : [num_tiles]                  (tiles_merger weight, flattened)
    """
    in_features = x.shape[-1]
    out_features = fc_w.shape[0]
    tile_size = math.ceil(in_features / num_tiles)
    pad = num_tiles * tile_size - in_features
    K = num_tiles * tile_size

    lead = x.shape[:-1]
    B = int(np.prod(lead)) if lead else 1
    xf = x.reshape(B, in_features)

    # Center-pad the feature axis exactly like the module (zeros are neutral).
    if pad:
        lpad = pad // 2
        rpad = pad - lpad
        xf = jnp.pad(xf, ((0, 0), (lpad, rpad)))
    # xf: [B, K]   (no transpose needed in either mode)

    compute_dtype = x.dtype
    out_dtype = x.dtype

    # ---- fold tiles_merger into the fc weight (tiny host-side op) ----------
    wt = fc_w.T.astype(jnp.float32)          # [tile_size, out_features]
    mw = merger_w.astype(jnp.float32)        # [num_tiles]
    if crossed:
        # padded feature index f = s*num_tiles + t  ('(ts nt) -> nt ts')
        w_big = (mw[None, :, None] * wt[:, None, :]).reshape(K, out_features)
    else:
        # padded feature index f = t*tile_size + s  ('(nt ts) -> nt ts')
        w_big = (mw[:, None, None] * wt[None, :, :]).reshape(K, out_features)
    if fc_b is None:
        b_eff = jnp.zeros((1, out_features), jnp.float32)
    else:
        b_eff = (jnp.sum(mw) * fc_b.astype(jnp.float32)).reshape(1, out_features)

    # ---- block sizes: lane-dense, well inside default scoped VMEM ----------
    bm = min(512, _round_up(B, 16))            # sublane-aligned (f32 & bf16)
    bn = min(512, _round_up(out_features, 128))  # lane-dense output
    bk = min(512, _round_up(K, 128))             # full-ish K per MXU push

    Mp = _round_up(B, bm)
    Np = _round_up(out_features, bn)
    Kp = _round_up(K, bk)

    xp = jnp.pad(xf, ((0, Mp - B), (0, Kp - K))).astype(compute_dtype)
    wp = jnp.pad(w_big, ((0, Kp - K), (0, Np - out_features))).astype(compute_dtype)
    bp = jnp.pad(b_eff, ((0, 0), (0, Np - out_features)))          # stays f32

    if np.dtype(out_dtype) == np.dtype(np.float32):
        kernel = _matmul_bias_f32_kernel
        scratch = []
    else:
        kernel = _matmul_bias_acc_kernel
        scratch = [pltpu.VMEM((bm, bn), jnp.float32)]

    out = pl.pallas_call(
        kernel,
        out_shape=jax.ShapeDtypeStruct((Mp, Np), out_dtype),
        grid_spec=pltpu.PrefetchScalarGridSpec(
            num_scalar_prefetch=0,
            grid=(Mp // bm, Np // bn, Kp // bk),
            in_specs=[
                pl.BlockSpec((bm, bk), lambda i, j, k: (i, k)),   # x block
                pl.BlockSpec((bk, bn), lambda i, j, k: (k, j)),   # W_big block
                pl.BlockSpec((1, bn), lambda i, j, k: (0, j)),    # eff. bias
            ],
            out_specs=pl.BlockSpec((bm, bn), lambda i, j, k: (i, j)),
            scratch_shapes=scratch,
        ),
        compiler_params=pltpu.CompilerParams(
            dimension_semantics=("parallel", "parallel", "arbitrary"),
        ),
    )(xp, wp, bp)

    out = out[:B, :out_features]
    return out.reshape(*lead, out_features)


# ----------------------------------------------------------------------------
# Pure-JAX reference mirroring the PyTorch forward exactly.
# ----------------------------------------------------------------------------
def tiled_linear_ref(x, fc_w, fc_b, merger_w, *, num_tiles, crossed=False):
    in_features = x.shape[-1]
    tile_size = math.ceil(in_features / num_tiles)
    pad = num_tiles * tile_size - in_features
    if pad:
        lpad = pad // 2
        rpad = pad - lpad
        pads = [(0, 0)] * (x.ndim - 1) + [(lpad, rpad)]
        y = jnp.pad(x, pads)
    else:
        y = x
    if crossed:
        y = y.reshape(*y.shape[:-1], tile_size, num_tiles)
        y = jnp.swapaxes(y, -1, -2)                     # ... nt ts
    else:
        y = y.reshape(*y.shape[:-1], num_tiles, tile_size)
    y = jnp.einsum("...ns,os->...no", y.astype(jnp.float32),
                   fc_w.astype(jnp.float32))            # tiled_fc
    if fc_b is not None:
        y = y + fc_b.astype(jnp.float32)
    y = jnp.swapaxes(y, -1, -2)                         # ... out nt
    y = jnp.einsum("...on,n->...o", y, merger_w.astype(jnp.float32))
    return y


if __name__ == "__main__":
    # Module config: in_features=30, out_features=32, num_tiles=4
    #   -> tile_size=8, pad=2 (lpad=1, rpad=1)
    in_features, out_features, num_tiles = 30, 32, 4
    tile_size = math.ceil(in_features / num_tiles)

    key = jax.random.PRNGKey(0)
    k_x, k_w, k_b, k_m = jax.random.split(key, 4)

    # Deterministic nn.Linear-style init (U(-1/sqrt(fan_in), 1/sqrt(fan_in)))
    fc_bound = 1.0 / math.sqrt(tile_size)
    mg_bound = 1.0 / math.sqrt(num_tiles)
    fc_w = jax.random.uniform(k_w, (out_features, tile_size), jnp.float32,
                              -fc_bound, fc_bound)
    fc_b = jax.random.uniform(k_b, (out_features,), jnp.float32,
                              -fc_bound, fc_bound)
    merger_w = jax.random.uniform(k_m, (num_tiles,), jnp.float32,
                                  -mg_bound, mg_bound)

    # Input with arbitrary leading dims, feature-last like the PyTorch module.
    x = jax.random.normal(k_x, (2, 8, in_features), jnp.float32)

    # f32 path, both tiling modes (exercises both W_big row orderings).
    for crossed in (False, True):
        out = tiled_linear_pallas(x, fc_w, fc_b, merger_w,
                                  num_tiles=num_tiles, crossed=crossed)
        out = jax.block_until_ready(out)
        ref = tiled_linear_ref(x, fc_w, fc_b, merger_w,
                               num_tiles=num_tiles, crossed=crossed)
        np.testing.assert_allclose(np.asarray(out), np.asarray(ref),
                                   rtol=1e-5, atol=1e-5)
        assert out.shape == (2, 8, out_features)

    # bf16 path (exercises the f32-scratch accumulator kernel).
    x_bf16 = x.astype(jnp.bfloat16)
    out_bf = tiled_linear_pallas(x_bf16, fc_w, fc_b, merger_w,
                                 num_tiles=num_tiles, crossed=False)
    out_bf = jax.block_until_ready(out_bf)
    ref_bf = tiled_linear_ref(x_bf16.astype(jnp.float32), fc_w, fc_b, merger_w,
                              num_tiles=num_tiles, crossed=False)
    np.testing.assert_allclose(np.asarray(out_bf, dtype=np.float32),
                               np.asarray(ref_bf), rtol=5e-2, atol=5e-2)
    assert out_bf.dtype == jnp.bfloat16

    print("KERNEL_OK")
</pallas_src>

<mosaic_0001>
module attributes {stable_mosaic.version = 11 : i64} {
  func.func @_matmul_bias_f32_kernel(%arg0: i32, %arg1: i32, %arg2: i32, %arg3: memref<16x128xf32, #tpu.memory_space<vmem>>, %arg4: memref<128x128xf32, #tpu.memory_space<vmem>>, %arg5: memref<1x128xf32, #tpu.memory_space<vmem>>, %arg6: memref<16x128xf32, #tpu.memory_space<vmem>>) attributes {dimension_semantics = [#tpu.dimension_semantics<parallel>, #tpu.dimension_semantics<parallel>, #tpu.dimension_semantics<arbitrary>], iteration_bounds = array<i64: 1, 1, 1>, scalar_prefetch = 0 : i64, scratch_operands = 0 : i64, tpu.core_type = #tpu.core_type<tc>, window_params = [{transform_indices = @transform_0, window_bounds = array<i64: 16, 128>}, {transform_indices = @transform_1, window_bounds = array<i64: 128, 128>}, {transform_indices = @transform_2, window_bounds = array<i64: 1, 128>}, {transform_indices = @transform_3, window_bounds = array<i64: 16, 128>}]} {
    %c0_i32 = arith.constant 0 : i32
    %0 = arith.cmpi eq, %arg2, %c0_i32 : i32
    %1 = arith.extui %0 : i1 to i32
    %c0_i32_0 = arith.constant 0 : i32
    %2 = arith.cmpi ne, %1, %c0_i32_0 : i32
    scf.if %2 {
      %cst_10 = arith.constant 0.000000e+00 : f32
      %12 = vector.broadcast %cst_10 : f32 to vector<16x128xf32>
      %c0_11 = arith.constant 0 : index
      %c0_12 = arith.constant 0 : index
      %13 = vector.load %arg6[%c0_11, %c0_12] : memref<16x128xf32, #tpu.memory_space<vmem>>, vector<16x128xf32>
      tpu.vector_store %arg6[%c0_11, %c0_12], %12 {strides = array<i32>} : memref<16x128xf32, #tpu.memory_space<vmem>>, vector<16x128xf32>,
    } else {
    }
    %c0 = arith.constant 0 : index
    %c0_1 = arith.constant 0 : index
    %3 = vector.load %arg6[%c0, %c0_1] : memref<16x128xf32, #tpu.memory_space<vmem>>, vector<16x128xf32>
    %c0_2 = arith.constant 0 : index
    %c0_3 = arith.constant 0 : index
    %4 = vector.load %arg3[%c0_2, %c0_3] : memref<16x128xf32, #tpu.memory_space<vmem>>, vector<16x128xf32>
    %c0_4 = arith.constant 0 : index
    %c0_5 = arith.constant 0 : index
    %5 = vector.load %arg4[%c0_4, %c0_5] : memref<128x128xf32, #tpu.memory_space<vmem>>, vector<128x128xf32>
    %cst = arith.constant dense<0.000000e+00> : vector<16x128xf32>
    %6 = tpu.matmul %4, %5, %cst {dimension_numbers = #tpu.dot_dimension_numbers<[1], [0], [0], [1], [0, 0, 1, 1], [], []>} : vector<16x128xf32>, vector<128x128xf32>, vector<16x128xf32> -> vector<16x128xf32>
    %7 = arith.addf %3, %6 : vector<16x128xf32>
    %c0_6 = arith.constant 0 : index
    %c0_7 = arith.constant 0 : index
    %8 = vector.load %arg6[%c0_6, %c0_7] : memref<16x128xf32, #tpu.memory_space<vmem>>, vector<16x128xf32>
    tpu.vector_store %arg6[%c0_6, %c0_7], %7 {strides = array<i32>} : memref<16x128xf32, #tpu.memory_space<vmem>>, vector<16x128xf32>,
    %c0_i32_8 = arith.constant 0 : i32
    %9 = arith.cmpi eq, %arg2, %c0_i32_8 : i32
    %10 = arith.extui %9 : i1 to i32
    %c0_i32_9 = arith.constant 0 : i32
    %11 = arith.cmpi ne, %10, %c0_i32_9 : i32
    scf.if %11 {
      %c0_10 = arith.constant 0 : index
      %c0_11 = arith.constant 0 : index
      %12 = vector.load %arg6[%c0_10, %c0_11] : memref<16x128xf32, #tpu.memory_space<vmem>>, vector<16x128xf32>
      %c0_12 = arith.constant 0 : index
      %c0_13 = arith.constant 0 : index
      %13 = vector.load %arg5[%c0_12, %c0_13] : memref<1x128xf32, #tpu.memory_space<vmem>>, vector<1x128xf32>
      %14 = vector.broadcast %13 : vector<1x128xf32> to vector<16x128xf32>
      %15 = arith.addf %12, %14 : vector<16x128xf32>
      %c0_14 = arith.constant 0 : index
      %c0_15 = arith.constant 0 : index
      %16 = vector.load %arg6[%c0_14, %c0_15] : memref<16x128xf32, #tpu.memory_space<vmem>>, vector<16x128xf32>
      tpu.vector_store %arg6[%c0_14, %c0_15], %15 {strides = array<i32>} : memref<16x128xf32, #tpu.memory_space<vmem>>, vector<16x128xf32>,
    } else {
    }
    return
  }
  func.func @transform_0(%arg0: i32, %arg1: i32, %arg2: i32) -> (i32, i32) {
    %c0_i32 = arith.constant 0 : i32
    return %arg0, %arg2 : i32, i32
  }
  func.func @transform_1(%arg0: i32, %arg1: i32, %arg2: i32) -> (i32, i32) {
    %c0_i32 = arith.constant 0 : i32
    return %arg2, %arg1 : i32, i32
  }
  func.func @transform_2(%arg0: i32, %arg1: i32, %arg2: i32) -> (i32, i32) {
    %c0_i32 = arith.constant 0 : i32
    %c0_i32_0 = arith.constant 0 : i32
    return %c0_i32, %arg1 : i32, i32
  }
  func.func @transform_3(%arg0: i32, %arg1: i32, %arg2: i32) -> (i32, i32) {
    %c0_i32 = arith.constant 0 : i32
    return %arg0, %arg1 : i32, i32
  }
}

</mosaic_0001>

<llo_original>
// kernel: tpu_custom_call.1
$region0: #{tpu_custom_call.1}
  #allocation0 [shape = 'u32[]', space=smem, size = 0x4, offset = 0x4, fixed_abs, tag = 'smem constant byte address 0x4 - core index']
  #allocation1 [shape = 'u32[144,128]{1,0:T(1,128)}', space=vmem, size = 0x12000, scoped, tag = 'internal scratch']
  %s0 = inlined_call_operand.hbm [shape: f32[16,128], index: 0, kind: input, shape index: {}]
  %s1 = inlined_call_operand.hbm [shape: f32[128,128], index: 1, kind: input, shape index: {}]
  %s2 = inlined_call_operand.vmem [shape: f32[1,128], index: 2, kind: input, shape index: {}]
  %s3 = inlined_call_operand.hbm [shape: f32[16,128], index: 3, kind: output, shape index: {}]
  %s4 = sld [smem:[#allocation0]]
  $region38: #{tpu_custom_call.1} parent=0
    _
  %s6 = ssub.s32 1, %s4
  %s7 = scalar_select 0, %s6, %s4
  $region1: #{tpu_custom_call.1} parent=0
    #allocation2 [shape = 'u8[8192]{0}', space=vmem, size = 0x2000, scoped, tag = 'input window, operand 0, single buffered']
    #allocation3 [shape = 's32[1]{0}', space=sflag, size = 0x4, scoped, tag = 'scoped memory for tpu_custom_call.1']
    #allocation4 [shape = 's32[1]{0}', space=sflag, size = 0x4, scoped, tag = 'scoped memory for tpu_custom_call.1']
    #allocation5 [shape = 'u8[65536]{0}', space=vmem, size = 0x10000, scoped, tag = 'input window, operand 1, single buffered']
    #allocation6 [shape = 's32[1]{0}', space=sflag, size = 0x4, scoped, tag = 'scoped memory for tpu_custom_call.1']
    #allocation7 [shape = 'u8[8192]{0}', space=vmem, size = 0x2000, scoped, tag = 'output window, operand 0, single buffered']
    %8 = vsyncpa [#allocation3], 0
    %9 = vsyncpa [#allocation6], 0
    %10 = vsyncpa [#allocation4], 0
    // Predicated region
    $region2: #{tpu_custom_call.1} parent=1 // pred_check
      _
    $region3: #{tpu_custom_call.1} parent=1 // pred_check_branch
      %12 = sbr.rel (0) target = $region5
    $region4: #{tpu_custom_call.1} parent=1 // pred_region
      %s14 = ssub.s32 256, 256
      %15 = vsyncadd [#allocation3], %s14
      %s16 = sshll.u32 [#allocation2], 4
      %s17 = int_to_ptr.vmem [resolvable:$true] %s16
      %22 = dma.hbm_to_vmem [thread:$0]  %s0, 256, %s17, [#allocation3], 128, 128, 8
    $region5: #{tpu_custom_call.1} parent=1 // pred_fallthru
      _
    // Predicated region
    $region6: #{tpu_custom_call.1} parent=1 // pred_check
      _
    $region7: #{tpu_custom_call.1} parent=1 // pred_check_branch
      %24 = sbr.rel (0) target = $region9
    $region8: #{tpu_custom_call.1} parent=1 // pred_region
      %s26 = ssub.s32 2048, 2048
      %27 = vsyncadd [#allocation6], %s26
      %s28 = sshll.u32 [#allocation5], 4
      %s29 = int_to_ptr.vmem [resolvable:$true] %s28
      %34 = dma.hbm_to_vmem [thread:$0]  %s1, 2048, %s29, [#allocation6], 128, 128, 8
    $region9: #{tpu_custom_call.1} parent=1 // pred_fallthru
      _
    // Predicated region
    $region10: #{tpu_custom_call.1} parent=1 // pred_check
      _
    $region11: #{tpu_custom_call.1} parent=1 // pred_check_branch
      %36 = sbr.rel (0) target = $region13
    $region12: #{tpu_custom_call.1} parent=1 // pred_region
      _
    $region13: #{tpu_custom_call.1} parent=1 // pred_fallthru
      _
    // Predicated region
    $region14: #{tpu_custom_call.1} parent=1 // pred_check
      _
    $region15: #{tpu_custom_call.1} parent=1 // pred_check_branch
      %38 = sbr.rel (0) target = $region17
    $region16: #{tpu_custom_call.1} parent=1 // pred_region
      %39 = dma.done [#allocation3], 256
    $region17: #{tpu_custom_call.1} parent=1 // pred_fallthru
      _
    // Predicated region
    $region18: #{tpu_custom_call.1} parent=1 // pred_check
      _
    $region19: #{tpu_custom_call.1} parent=1 // pred_check_branch
      %41 = sbr.rel (0) target = $region21
    $region20: #{tpu_custom_call.1} parent=1 // pred_region
      %42 = dma.done [#allocation6], 2048
    $region21: #{tpu_custom_call.1} parent=1 // pred_fallthru
      _
    %p43 = scmp.eq.s32.totalorder 0, 0
    // Predicated region
    $region22: #{tpu_custom_call.1} parent=1 // pred_check
      %p44 = pneg %p43
    $region23: #{tpu_custom_call.1} parent=1 // pred_check_branch
      %46 = sbr.rel (%p44) target = $region25
    $region24: #{tpu_custom_call.1} parent=1 // pred_region
      %47 = vst [vmem:[#allocation7] sm:$0xff] 0.0
      %48 = vst [vmem:[#allocation7 + $0x8] sm:$0xff] 0.0
    $region25: #{tpu_custom_call.1} parent=1 // pred_fallthru
      _
    %v49 = vld [vmem:[#allocation7] sm:$0xff]
    %v50 = vld [vmem:[#allocation7 + $0x8] sm:$0xff]
    %v51 = vld [vmem:[#allocation2] sm:$0xff]
    %v52 = vld [vmem:[#allocation2 + $0x8] sm:$0xff]
    %v53 = vld [vmem:[#allocation5] sm:$0xff]
    %v54 = vld [vmem:[#allocation5 + $0x8] sm:$0xff]
    %v55 = vld [vmem:[#allocation5 + $0x10] sm:$0xff]
    %v56 = vld [vmem:[#allocation5 + $0x18] sm:$0xff]
    %v57 = vld [vmem:[#allocation5 + $0x20] sm:$0xff]
    %v58 = vld [vmem:[#allocation5 + $0x28] sm:$0xff]
    %v59 = vld [vmem:[#allocation5 + $0x30] sm:$0xff]
    %v60 = vld [vmem:[#allocation5 + $0x38] sm:$0xff]
    %v61 = vld [vmem:[#allocation5 + $0x40] sm:$0xff]
    %v62 = vld [vmem:[#allocation5 + $0x48] sm:$0xff]
    %v63 = vld [vmem:[#allocation5 + $0x50] sm:$0xff]
    %v64 = vld [vmem:[#allocation5 + $0x58] sm:$0xff]
    %v65 = vld [vmem:[#allocation5 + $0x60] sm:$0xff]
    %v66 = vld [vmem:[#allocation5 + $0x68] sm:$0xff]
    %v67 = vld [vmem:[#allocation5 + $0x70] sm:$0xff]
    %v68 = vld [vmem:[#allocation5 + $0x78] sm:$0xff]
    %69 = vmatprep.subr.mxu0 0.0
    %70 = vmatpush1.msra.mxu0 %v68
    %71 = vmatprep.subr.mxu0 0.0
    %72 = vmatpush1.msra.mxu0 %v67
    %73 = vmatprep.subr.mxu0 0.0
    %74 = vmatpush1.msra.mxu0 %v66
    %75 = vmatprep.subr.mxu0 0.0
    %76 = vmatpush1.msra.mxu0 %v65
    %77 = vmatprep.subr.mxu0 0.0
    %78 = vmatpush1.msra.mxu0 %v64
    %79 = vmatprep.subr.mxu0 0.0
    %80 = vmatpush1.msra.mxu0 %v63
    %81 = vmatprep.subr.mxu0 0.0
    %82 = vmatpush1.msra.mxu0 %v62
    %83 = vmatprep.subr.mxu0 0.0
    %84 = vmatpush1.msra.mxu0 %v61
    %85 = vmatprep.subr.mxu0 0.0
    %86 = vmatpush1.msra.mxu0 %v60
    %87 = vmatprep.subr.mxu0 0.0
    %88 = vmatpush1.msra.mxu0 %v59
    %89 = vmatprep.subr.mxu0 0.0
    %90 = vmatpush1.msra.mxu0 %v58
    %91 = vmatprep.subr.mxu0 0.0
    %92 = vmatpush1.msra.mxu0 %v57
    %93 = vmatprep.subr.mxu0 0.0
    %94 = vmatpush1.msra.mxu0 %v56
    %95 = vmatprep.subr.mxu0 0.0
    %96 = vmatpush1.msra.mxu0 %v55
    %97 = vmatprep.subr.mxu0 0.0
    %98 = vmatpush1.msra.mxu0 %v54
    %99 = vmatprep.subr.mxu0 0.0
    %100 = vmatpush1.msra.mxu0 %v53
    %101 = vmatprep.subr.mxu0 0.0
    %102 = vmatpush2.msra.mxu0 0.0
    %103 = vmatprep.subr.mxu0 0.0
    %104 = vmatpush2.msra.mxu0 0.0
    %105 = vmatprep.subr.mxu0 0.0
    %106 = vmatpush2.msra.mxu0 0.0
    %107 = vmatprep.subr.mxu0 0.0
    %108 = vmatpush2.msra.mxu0 0.0
    %109 = vmatprep.subr.mxu0 0.0
    %110 = vmatpush2.msra.mxu0 0.0
    %111 = vmatprep.subr.mxu0 0.0
    %112 = vmatpush2.msra.mxu0 0.0
    %113 = vmatprep.subr.mxu0 0.0
    %114 = vmatpush2.msra.mxu0 0.0
    %115 = vmatprep.subr.mxu0 0.0
    %116 = vmatpush2.msra.mxu0 0.0
    %117 = vmatprep.subr.mxu0 0.0
    %118 = vmatpush2.msra.mxu0 0.0
    %119 = vmatprep.subr.mxu0 0.0
    %120 = vmatpush2.msra.mxu0 0.0
    %121 = vmatprep.subr.mxu0 0.0
    %122 = vmatpush2.msra.mxu0 0.0
    %123 = vmatprep.subr.mxu0 0.0
    %124 = vmatpush2.msra.mxu0 0.0
    %125 = vmatprep.subr.mxu0 0.0
    %126 = vmatpush2.msra.mxu0 0.0
    %127 = vmatprep.subr.mxu0 0.0
    %128 = vmatpush2.msra.mxu0 0.0
    %129 = vmatprep.subr.mxu0 0.0
    %130 = vmatpush2.msra.mxu0 0.0
    %131 = vmatprep.subr.mxu0 0.0
    %132 = vmatpush2.msra.mxu0 0.0
    %133 = vmatprep.mubr.f32.mxu0 0.0
    %134 = vmatmul.mubr.f32.gmra.mxu0 %v51
    %v135 = vpop.f32.mrf.mxu0
    %v136 = vadd.f32 0.0, %v135
    %v137 = vpop.f32.mrf.mxu0
    %138 = vmatprep.mubr.f32.mxu0 0.0
    %139 = vmatmul.mubr.f32.gmra.mxu0 %v52
    %v140 = vpop.f32.mrf.mxu0
    %v141 = vadd.f32 0.0, %v140
    %v142 = vpop.f32.mrf.mxu0
    %143 = vdwg.mxu0
    %v144 = vadd.f32 %v49, %v136
    %v145 = vadd.f32 %v50, %v141
    %146 = vst [vmem:[#allocation7] sm:$0xff] %v144
    %147 = vst [vmem:[#allocation7 + $0x8] sm:$0xff] %v145
    // Predicated region
    $region26: #{tpu_custom_call.1} parent=1 // pred_check
      %p148 = pneg %p43
    $region27: #{tpu_custom_call.1} parent=1 // pred_check_branch
      %150 = sbr.rel (%p148) target = $region29
    $region28: #{tpu_custom_call.1} parent=1 // pred_region
      %v151 = vld [vmem:[#allocation7] sm:$0xff]
      %v152 = vld [vmem:[#allocation7 + $0x8] sm:$0xff]
      %v153 = vld [vmem:[%s2] sm:$0x1]
      %v155 = vlaneseq
      %v156 = vshrl.u32 %v155, 7
      %v157 = vsub.s32 0, %v156
      %v158 = vrot.slane %v153, %v157
      %v160 = vadd.f32 %v151, %v158
      %v161 = vadd.f32 %v152, %v158
      %162 = vst [vmem:[#allocation7] sm:$0xff] %v160
      %163 = vst [vmem:[#allocation7 + $0x8] sm:$0xff] %v161
    $region29: #{tpu_custom_call.1} parent=1 // pred_fallthru
      _
    // Predicated region
    $region30: #{tpu_custom_call.1} parent=1 // pred_check
      _
    $region31: #{tpu_custom_call.1} parent=1 // pred_check_branch
      %165 = sbr.rel (0) target = $region33
    $region32: #{tpu_custom_call.1} parent=1 // pred_region
      %s167 = ssub.s32 256, 256
      %168 = vsyncadd [#allocation4], %s167
      %s169 = sshll.u32 [#allocation7], 4
      %s170 = int_to_ptr.vmem [resolvable:$true] %s169
      %175 = dma.vmem_to_hbm [thread:$0]  %s170, 256, %s3, [#allocation4], 128, 128, 8
    $region33: #{tpu_custom_call.1} parent=1 // pred_fallthru
      _
    // Predicated region
    $region34: #{tpu_custom_call.1} parent=1 // pred_check
      _
    $region35: #{tpu_custom_call.1} parent=1 // pred_check_branch
      %177 = sbr.rel (0) target = $region37
    $region36: #{tpu_custom_call.1} parent=1 // pred_region
      %178 = dma.done [#allocation4], 256
    $region37: #{tpu_custom_call.1} parent=1 // pred_fallthru
      _
    %179 = vsyncpa [#allocation3], 1
    %180 = vsyncpa [#allocation6], 1
    %181 = vsyncpa [#allocation4], 1

</llo_original>
